<compile_context>
chip_gen: v6e
topology: v6e:2x2x1
jax: 0.10.0
libtpu: 0.0.40
codegen_flags: <defaults>
</compile_context>

<pallas_src>
import jax
import jax.numpy as jnp
from jax.experimental import pallas as pl
from jax.experimental.pallas import tpu as pltpu

DEFAULT_EPS = 0.5
DEFAULT_B = 3.0


def _round_up(x, m):
    return (x + m - 1) // m * m


def _gt_kernel(c_ref, x_ref, w_ref, o_ref):
    # c_ref: (1,) f32 in SMEM -> c = B*(bias - eps)
    # x_ref: (tn, D) tile of xs in its natural layout
    # w_ref: (1, D)  pre-scaled weights (B*w), same dtype as xs
    # o_ref: (tn, 1) output tile
    prod = x_ref[...] * w_ref[...]                 # VPU (bf16-native on v6e/v7x)
    expr = jnp.sum(prod.astype(jnp.float32), axis=-1, keepdims=True)  # lane reduce, f32 acc
    o_ref[...] = jax.nn.sigmoid(expr + c_ref[0])   # EUP exp + VPU


def _pick_tn(N, D, itemsize):
    # Target ~4 MiB of xs per tile (8 MiB double-buffered), multiple of 128.
    target_bytes = 4 * 1024 * 1024
    cap = max(128, (target_bytes // (D * itemsize)) // 128 * 128)
    # Keep >=2 grid steps once N > 128 so v7x's two TensorCores both get work.
    half = max(128, _round_up(pl.cdiv(N, 2), 128))
    return int(min(cap, half))


def gt_forward(xs, w, bias, B=DEFAULT_B, eps=DEFAULT_EPS, tn=None):
    """Pallas equivalent of Gt(expr=Linear(w, bias), B, eps).forward(xs).

    xs: (N, D) samples (f32 or bf16); w: (D,); bias: scalar/(1,).
    Returns (N, 1) float32, one truth value per sample.
    """
    N, D = xs.shape
    itemsize = jnp.dtype(xs.dtype).itemsize

    if tn is None:
        tn = _pick_tn(N, D, itemsize)
    tn = max(8, min(tn, _round_up(N, 8)))

    # Fold scalars: w_scaled = B*w (dot), c = B*(bias - eps).
    b_f = jnp.asarray(B, jnp.float32).reshape(())
    w_scaled = (b_f * jnp.asarray(w, jnp.float32)).reshape(1, D).astype(xs.dtype)
    c = (b_f * (jnp.asarray(bias, jnp.float32).reshape(()) -
                jnp.asarray(eps, jnp.float32).reshape(()))).reshape(1)  # (1,) f32

    grid = (pl.cdiv(N, tn),)
    grid_spec = pltpu.PrefetchScalarGridSpec(
        num_scalar_prefetch=1,
        grid=grid,
        in_specs=[
            pl.BlockSpec((tn, D), lambda i, c: (i, 0)),   # xs tile (natural layout)
            pl.BlockSpec((1, D), lambda i, c: (0, 0)),    # scaled weights (resident)
        ],
        out_specs=pl.BlockSpec((tn, 1), lambda i, c: (i, 0)),
    )

    out = pl.pallas_call(
        _gt_kernel,
        out_shape=jax.ShapeDtypeStruct((N, 1), jnp.float32),
        grid_spec=grid_spec,
        compiler_params=pltpu.CompilerParams(
            dimension_semantics=("parallel",),       # shard N across v7x's 2 TCs
            vmem_limit_bytes=32 * 1024 * 1024,       # >= double-buffered tiles on all gens
        ),
        cost_estimate=pl.CostEstimate(
            flops=2 * N * D,
            transcendentals=N,
            bytes_accessed=int(N * D * itemsize + D * itemsize + N * 4),
        ),
    )(c, xs, w_scaled)

    return out


def gt_reference(xs, w, bias, B=DEFAULT_B, eps=DEFAULT_EPS):
    expr = xs.astype(jnp.float32) @ jnp.asarray(w, jnp.float32).reshape(-1, 1)
    expr = expr + jnp.asarray(bias, jnp.float32)
    return jax.nn.sigmoid(B * (expr - eps))


if __name__ == "__main__":
    key = jax.random.PRNGKey(0)
    k_x, k_w, k_b = jax.random.split(key, 3)

    # samples x variables; N not a multiple of the tile size to exercise the
    # partial tail block (no host-side padding).
    N, D = 300, 32
    xs = jax.random.normal(k_x, (N, D), dtype=jnp.float32)
    w = jax.random.normal(k_w, (D,), dtype=jnp.float32) * 0.1
    bias = jax.random.normal(k_b, (1,), dtype=jnp.float32) * 0.1

    ref = gt_reference(xs, w, bias, B=DEFAULT_B, eps=DEFAULT_EPS)

    # Multi-step grid with a partial last block (128 + 128 + 44).
    out_tiled = gt_forward(xs, w, bias, B=DEFAULT_B, eps=DEFAULT_EPS, tn=128)
    out_tiled = jax.block_until_ready(out_tiled)
    assert out_tiled.shape == (N, 1)
    assert jnp.allclose(out_tiled, ref, atol=1e-5, rtol=1e-5)

    # Auto tile size (2 grid steps here: tn=256 -> partial tail of 44).
    out_auto = gt_forward(xs, w, bias, B=DEFAULT_B, eps=DEFAULT_EPS)
    out_auto = jax.block_until_ready(out_auto)
    assert out_auto.shape == (N, 1)
    assert jnp.allclose(out_auto, ref, atol=1e-5, rtol=1e-5)

    # bf16 inputs: half the HBM traffic, bf16 multiply + f32 accumulate.
    xs_bf = xs.astype(jnp.bfloat16)
    out_bf = gt_forward(xs_bf, w, bias, B=DEFAULT_B, eps=DEFAULT_EPS)
    out_bf = jax.block_until_ready(out_bf)
    ref_bf = gt_reference(xs_bf, w, bias, B=DEFAULT_B, eps=DEFAULT_EPS)
    assert jnp.allclose(out_bf, ref_bf, atol=2e-2, rtol=2e-2)

    print("KERNEL_OK")
</pallas_src>

<mosaic_0001>
module attributes {stable_mosaic.version = 11 : i64} {
  func.func @_gt_kernel(%arg0: i32, %arg1: memref<1xf32, #tpu.memory_space<smem>>, %arg2: memref<128x32xf32, #tpu.memory_space<vmem>>, %arg3: memref<1x32xf32, #tpu.memory_space<vmem>>, %arg4: memref<128x1xf32, #tpu.memory_space<vmem>>) attributes {dimension_semantics = [#tpu.dimension_semantics<parallel>], iteration_bounds = array<i64: 3>, scalar_prefetch = 1 : i64, scratch_operands = 0 : i64, tpu.core_type = #tpu.core_type<tc>, window_params = [{transform_indices = @transform_0, window_bounds = array<i64: 128, 32>}, {pipeline_mode = #tpu.pipeline_mode<synchronous>, transform_indices = @transform_1, window_bounds = array<i64: 1, 32>}, {transform_indices = @transform_2, window_bounds = array<i64: 128, 1>}]} {
    %c0 = arith.constant 0 : index
    %c0_0 = arith.constant 0 : index
    %0 = vector.load %arg2[%c0, %c0_0] : memref<128x32xf32, #tpu.memory_space<vmem>>, vector<128x32xf32>
    %c0_1 = arith.constant 0 : index
    %c0_2 = arith.constant 0 : index
    %1 = vector.load %arg3[%c0_1, %c0_2] : memref<1x32xf32, #tpu.memory_space<vmem>>, vector<1x32xf32>
    %2 = vector.broadcast %1 : vector<1x32xf32> to vector<128x32xf32>
    %3 = arith.mulf %0, %2 : vector<128x32xf32>
    %cst = arith.constant dense<0.000000e+00> : vector<128xf32>
    %4 = vector.multi_reduction <add>, %3, %cst [1] : vector<128x32xf32> to vector<128xf32>
    %5 = vector.shape_cast %4 : vector<128xf32> to vector<128x1xf32>
    %c0_3 = arith.constant 0 : index
    %6 = memref.load %arg1[%c0_3] : memref<1xf32, #tpu.memory_space<smem>>
    %7 = vector.broadcast %6 : f32 to vector<128x1xf32>
    %8 = arith.addf %5, %7 : vector<128x1xf32>
    %9 = arith.negf %8 : vector<128x1xf32>
    %10 = math.exp %9 : vector<128x1xf32>
    %cst_4 = arith.constant 1.000000e+00 : f32
    %11 = vector.broadcast %cst_4 : f32 to vector<128x1xf32>
    %12 = arith.addf %11, %10 : vector<128x1xf32>
    %13 = arith.divf %11, %12 : vector<128x1xf32>
    %c0_5 = arith.constant 0 : index
    %c0_6 = arith.constant 0 : index
    %14 = vector.load %arg4[%c0_5, %c0_6] : memref<128x1xf32, #tpu.memory_space<vmem>>, vector<128x1xf32>
    tpu.vector_store %arg4[%c0_5, %c0_6], %13 {strides = array<i32>} : memref<128x1xf32, #tpu.memory_space<vmem>>, vector<128x1xf32>,
    return
  }
  func.func @transform_0(%arg0: i32, %arg1: memref<1xf32, #tpu.memory_space<smem>>) -> (i32, i32) {
    %c0_i32 = arith.constant 0 : i32
    %c0_i32_0 = arith.constant 0 : i32
    return %arg0, %c0_i32 : i32, i32
  }
  func.func @transform_1(%arg0: i32, %arg1: memref<1xf32, #tpu.memory_space<smem>>) -> (i32, i32) {
    %c0_i32 = arith.constant 0 : i32
    %c0_i32_0 = arith.constant 0 : i32
    %c0_i32_1 = arith.constant 0 : i32
    return %c0_i32, %c0_i32_0 : i32, i32
  }
  func.func @transform_2(%arg0: i32, %arg1: memref<1xf32, #tpu.memory_space<smem>>) -> (i32, i32) {
    %c0_i32 = arith.constant 0 : i32
    %c0_i32_0 = arith.constant 0 : i32
    return %arg0, %c0_i32 : i32, i32
  }
}

</mosaic_0001>

<llo_original>
// kernel: tpu_custom_call.1
$region0: #{tpu_custom_call.1}
  #allocation0 [shape = 'u32[]', space=smem, size = 0x4, offset = 0x4, fixed_abs, tag = 'smem constant byte address 0x4 - core index']
  #allocation1 [shape = 'u32[144,128]{1,0:T(1,128)}', space=vmem, size = 0x12000, scoped, tag = 'internal scratch']
  #allocation2 [shape = 's32[1]{0}', space=sflag, size = 0x4, scoped, tag = 'scoped memory for tpu_custom_call.1']
  #allocation3 [shape = 'f32[1]{0:T(128)S(6)}', space=smem, size = 0x200, scoped, tag = 'prefetched SMEM operand 0']
  %s0 = inlined_call_operand.<no memory space> [shape: f32[1], index: 0, kind: input, shape index: {}]
  %s1 = inlined_call_operand.vmem [shape: f32[300,32], index: 1, kind: input, shape index: {}]
  %s2 = inlined_call_operand.vmem [shape: f32[1,32], index: 2, kind: input, shape index: {}]
  %s3 = inlined_call_operand.vmem [shape: f32[300,1], index: 3, kind: output, shape index: {}]
  %s4 = sld [smem:[#allocation0]]
  $region89: #{tpu_custom_call.1} parent=0
    _
  %s6 = ssub.s32 1, %s4
  %s7 = scalar_select 0, %s6, %s4
  %8 = sst [smem:[#allocation3]] %s0
  $region1: #{tpu_custom_call.1} parent=0
    #allocation4 [shape = 'u8[131072]{0}', space=vmem, size = 0x20000, scoped, tag = 'output window, operand 0']
    loop: start=0, step=1, limit=5
    $region2: #{tpu_custom_call.1} parent=1 // loop_pre_header
      _
    $region3: #{tpu_custom_call.1} parent=1 // loop_header
      %s10 = sphi 0, %s14
      %p11 = scmp.ge.s32.totalorder %s10, 5
      %s20 = sphi 0, %s22
      %s23 = sphi 0, %s20
      %s24 = sphi 0, %s23
      %s40 = sphi 0, %s24
      %s44 = sphi 0, %s44
      %s46 = sphi 0, %s44
      %s47 = sphi 0, %s46
      %s61 = sphi 0, %s47
      %s67 = sphi 0, %s69
      %s70 = sphi 0, %s67
      %s71 = sphi 0, %s70
      %s87 = sphi 0, %s71
    $region4: #{tpu_custom_call.1} parent=1 // loop_header_branch
      %13 = sbr.rel (%p11) target = $region8
    $region5: #{tpu_custom_call.1} parent=1 // loop_body
      %s15 = ssub.s32 %s10, 1
      %s16 = ssub.s32 %s10, 2
      %s17 = sadd.s32 %s10, 1
      %s18 = ssub.s32 %s10, %s17
      %p19 = scmp.eq.s32.totalorder %s18, 0
      %s21 = sadd.s32 %s20, 1
      %s22 = scalar_select %p19, %s20, %s21
      %p25 = pneg %p19
      %p26 = scmp.eq.s32.totalorder %s10, 2
      %p27 = por %p25, %p26
      %p28 = scmp.ne.s32.totalorder %s20, %s23
      %p29 = scmp.eq.s32.totalorder %s10, 0
      %p30 = por %p28, %p29
      %p31 = scmp.ne.s32.totalorder %s20, %s23
      %p32 = scmp.eq.s32.totalorder %s15, 2
      %p33 = por %p31, %p32
      %p34 = scmp.ne.s32.totalorder %s23, %s24
      %p35 = scmp.eq.s32.totalorder %s15, 0
      %p36 = por %p34, %p35
      %p37 = scmp.ne.s32.totalorder %s23, %s24
      %p38 = scmp.eq.s32.totalorder %s16, 2
      %p39 = por %p37, %p38
      %p41 = scmp.ne.s32.totalorder %s24, %s40
      %p42 = scmp.eq.s32.totalorder %s16, 0
      %p43 = por %p41, %p42
      %s45 = sadd.s32 %s44, 1
      %p48 = scmp.eq.s32.totalorder %s10, 2
      %p49 = scmp.ne.s32.totalorder %s44, %s46
      %p50 = scmp.eq.s32.totalorder %s10, 0
      %p51 = por %p49, %p50
      %p52 = scmp.ne.s32.totalorder %s44, %s46
      %p53 = scmp.eq.s32.totalorder %s15, 2
      %p54 = por %p52, %p53
      %p55 = scmp.ne.s32.totalorder %s46, %s47
      %p56 = scmp.eq.s32.totalorder %s15, 0
      %p57 = por %p55, %p56
      %p58 = scmp.ne.s32.totalorder %s46, %s47
      %p59 = scmp.eq.s32.totalorder %s16, 2
      %p60 = por %p58, %p59
      %p62 = scmp.ne.s32.totalorder %s47, %s61
      %p63 = scmp.eq.s32.totalorder %s16, 0
      %p64 = por %p62, %p63
      %s65 = ssub.s32 %s10, %s17
      %p66 = scmp.eq.s32.totalorder %s65, 0
      %s68 = sadd.s32 %s67, 1
      %s69 = scalar_select %p66, %s67, %s68
      %p72 = pneg %p66
      %p73 = scmp.eq.s32.totalorder %s10, 2
      %p74 = por %p72, %p73
      %p75 = scmp.ne.s32.totalorder %s67, %s70
      %p76 = scmp.eq.s32.totalorder %s10, 0
      %p77 = por %p75, %p76
      %p78 = scmp.ne.s32.totalorder %s67, %s70
      %p79 = scmp.eq.s32.totalorder %s15, 2
      %p80 = por %p78, %p79
      %p81 = scmp.ne.s32.totalorder %s70, %s71
      %p82 = scmp.eq.s32.totalorder %s15, 0
      %p83 = por %p81, %p82
      %p84 = scmp.ne.s32.totalorder %s70, %s71
      %p85 = scmp.eq.s32.totalorder %s16, 2
      %p86 = por %p84, %p85
      %p88 = scmp.ne.s32.totalorder %s71, %s87
      %p89 = scmp.eq.s32.totalorder %s16, 0
      %p90 = por %p88, %p89
      %p91 = scmp.le.s32.totalorder 1, %s10
      %p92 = scmp.lt.s32.totalorder %s10, 4
      %p93 = pnand %p91, %p92
      %p94 = pneg %p93
      // Predicated region
      $region9: #{tpu_custom_call.1} parent=5 // pred_check
        _
      $region10: #{tpu_custom_call.1} parent=5 // pred_check_branch
        %96 = sbr.rel (%p93) target = $region12
      $region11: #{tpu_custom_call.1} parent=5 // pred_region
        %s97 = ssub.s32 %s10, 1
        // Predicated region
        $region13: #{tpu_custom_call.1} parent=11 // pred_check
          %p98 = pneg %p57
        $region14: #{tpu_custom_call.1} parent=11 // pred_check_branch
          %100 = sbr.rel (%p98) target = $region16
        $region15: #{tpu_custom_call.1} parent=11 // pred_region
          _
        $region16: #{tpu_custom_call.1} parent=11 // pred_fallthru
          _
      $region12: #{tpu_custom_call.1} parent=5 // pred_fallthru
        _
      %p101 = scmp.lt.s32.totalorder %s10, 3
      // Predicated region
      $region17: #{tpu_custom_call.1} parent=5 // pred_check
        %p102 = pneg %p101
      $region18: #{tpu_custom_call.1} parent=5 // pred_check_branch
        %104 = sbr.rel (%p102) target = $region20
      $region19: #{tpu_custom_call.1} parent=5 // pred_region
        // Predicated region
        $region21: #{tpu_custom_call.1} parent=19 // pred_check
          %p105 = pneg %p30
        $region22: #{tpu_custom_call.1} parent=19 // pred_check_branch
          %107 = sbr.rel (%p105) target = $region24
        $region23: #{tpu_custom_call.1} parent=19 // pred_region
          %s108 = smul.u32 16, %s10
          %s109 = ssub.s32 38, %s108
          %p110 = scmp.lt.s32.totalorder %s109, 16
          %s111 = scalar_select %p110, %s109, 16
          %s112 = smul.u32 128, %s111
          %p113 = scmp.lt.s32.totalorder %s108, 37
          %s114 = scalar_select %p113, %s108, 37
          %s115 = smul.addr %s114, 8
          %s116 = scalar_lea.vmem %s1, %s115
          %s117 = smul.u32 16, %s10
          %s118 = ssub.s32 38, %s117
          %p119 = scmp.lt.s32.totalorder %s118, 16
          %s120 = scalar_select %p119, %s118, 16
          %s121 = smul.u32 128, %s120
        $region24: #{tpu_custom_call.1} parent=19 // pred_fallthru
          _
      $region20: #{tpu_custom_call.1} parent=5 // pred_fallthru
        _
      %p122 = scmp.le.s32.totalorder 1, %s10
      %p123 = scmp.lt.s32.totalorder %s10, 4
      %p124 = pnand %p122, %p123
      %p125 = pneg %p124
      // Predicated region
      $region25: #{tpu_custom_call.1} parent=5 // pred_check
        _
      $region26: #{tpu_custom_call.1} parent=5 // pred_check_branch
        %127 = sbr.rel (%p124) target = $region28
      $region27: #{tpu_custom_call.1} parent=5 // pred_region
        %s128 = ssub.s32 %s10, 1
        %s129 = smul.u32 16, %s15
        %s130 = ssub.s32 38, %s129
        %p131 = scmp.lt.s32.totalorder %s130, 16
        %s132 = scalar_select %p131, %s130, 16
        %s133 = smul.u32 128, %s132
        %p134 = scmp.lt.s32.totalorder %s129, 37
        %s135 = scalar_select %p134, %s129, 37
        %s136 = smul.addr %s135, 8
        %s137 = scalar_lea.vmem %s1, %s136
        %p138 = pneg %p36
        %p139 = pneg %p33
        %p140 = pneg %p57
        %p141 = pneg %p54
        %p142 = pneg %p83
        %p143 = pneg %p80
        %s144 = sand.u32 %s70, 1
        %s145 = sand.u32 %s70, 1
        %s146 = smul.addr %s145, 128
        %s147 = scalar_lea.vmem [#allocation4], %s146
        %s148 = smul.u32 16, %s15
        %s149 = ssub.s32 38, %s148
        %p150 = scmp.lt.s32.totalorder %s149, 16
        %s151 = scalar_select %p150, %s149, 16
        %s152 = smul.u32 128, %s151
        %p153 = scmp.lt.s32.totalorder %s148, 37
        %s154 = scalar_select %p153, %s148, 37
        %s155 = smul.addr %s154, 8
        %s156 = scalar_lea.vmem %s1, %s155
        %s157 = smul.u32 16, %s15
        %s158 = ssub.s32 38, %s157
        %p159 = scmp.lt.s32.totalorder %s158, 16
        %s160 = scalar_select %p159, %s158, 16
        %s161 = smul.u32 128, %s160
        %s162 = smul.u32 16, %s15
        %s163 = ssub.s32 38, %s162
        %p164 = scmp.lt.s32.totalorder %s163, 16
        %s165 = scalar_select %p164, %s163, 16
        %s166 = smul.u32 128, %s165
        %v167 = vld [vmem:[%s156] sm:$0xff]
        %v168 = vld [vmem:[%s156 + $0x8] sm:$0xff]
        %v169 = vld [vmem:[%s156 + $0x10] sm:$0xff]
        %v170 = vld [vmem:[%s156 + $0x18] sm:$0xff]
        %v171 = vld [vmem:[%s156 + $0x20] sm:$0xff]
        %v172 = vld [vmem:[%s156 + $0x28] sm:$0xff]
        %v173 = vld [vmem:[%s156 + $0x30] sm:$0xff]
        %v174 = vld [vmem:[%s156 + $0x38] sm:$0xff]
        %v175 = vld [vmem:[%s156 + $0x40] sm:$0xff]
        %v176 = vld [vmem:[%s156 + $0x48] sm:$0xff]
        %v177 = vld [vmem:[%s156 + $0x50] sm:$0xff]
        %v178 = vld [vmem:[%s156 + $0x58] sm:$0xff]
        %v179 = vld [vmem:[%s156 + $0x60] sm:$0xff]
        %v180 = vld [vmem:[%s156 + $0x68] sm:$0xff]
        %v181 = vld [vmem:[%s156 + $0x70] sm:$0xff]
        %v182 = vld [vmem:[%s156 + $0x78] sm:$0xff]
        %v183 = vld [vmem:[%s2] sm:$0x1]
        %v185 = vlaneseq
        %v186 = vshrl.u32 %v185, 7
        %v187 = vsub.s32 0, %v186
        %v188 = vrot.slane %v183, %v187
        %v190 = vmul.f32 %v167, %v188
        %v191 = vmul.f32 %v168, %v188
        %v192 = vmul.f32 %v169, %v188
        %v193 = vmul.f32 %v170, %v188
        %v194 = vmul.f32 %v171, %v188
        %v195 = vmul.f32 %v172, %v188
        %v196 = vmul.f32 %v173, %v188
        %v197 = vmul.f32 %v174, %v188
        %v198 = vmul.f32 %v175, %v188
        %v199 = vmul.f32 %v176, %v188
        %v200 = vmul.f32 %v177, %v188
        %v201 = vmul.f32 %v178, %v188
        %v202 = vmul.f32 %v179, %v188
        %v203 = vmul.f32 %v180, %v188
        %v204 = vmul.f32 %v181, %v188
        %v205 = vmul.f32 %v182, %v188
        %vm206 = vcmask 261120
        %v207 = vsel %vm206, %v190, 0.0
        %208 = vadd.xlane.f32.xlu0 %v207
        %v209 = vpop.xlane.xlu0 %208
        %v210 = vsel %vm206, %v191, 0.0
        %211 = vadd.xlane.f32.xlu0 %v210
        %v212 = vpop.xlane.xlu0 %211
        %v213 = vsel %vm206, %v192, 0.0
        %214 = vadd.xlane.f32.xlu0 %v213
        %v215 = vpop.xlane.xlu0 %214
        %v216 = vsel %vm206, %v193, 0.0
        %217 = vadd.xlane.f32.xlu0 %v216
        %v218 = vpop.xlane.xlu0 %217
        %v219 = vsel %vm206, %v194, 0.0
        %220 = vadd.xlane.f32.xlu0 %v219
        %v221 = vpop.xlane.xlu0 %220
        %v222 = vsel %vm206, %v195, 0.0
        %223 = vadd.xlane.f32.xlu0 %v222
        %v224 = vpop.xlane.xlu0 %223
        %v225 = vsel %vm206, %v196, 0.0
        %226 = vadd.xlane.f32.xlu0 %v225
        %v227 = vpop.xlane.xlu0 %226
        %v228 = vsel %vm206, %v197, 0.0
        %229 = vadd.xlane.f32.xlu0 %v228
        %v230 = vpop.xlane.xlu0 %229
        %v231 = vsel %vm206, %v198, 0.0
        %232 = vadd.xlane.f32.xlu0 %v231
        %v233 = vpop.xlane.xlu0 %232
        %v234 = vsel %vm206, %v199, 0.0
        %235 = vadd.xlane.f32.xlu0 %v234
        %v236 = vpop.xlane.xlu0 %235
        %v237 = vsel %vm206, %v200, 0.0
        %238 = vadd.xlane.f32.xlu0 %v237
        %v239 = vpop.xlane.xlu0 %238
        %v240 = vsel %vm206, %v201, 0.0
        %241 = vadd.xlane.f32.xlu0 %v240
        %v242 = vpop.xlane.xlu0 %241
        %v243 = vsel %vm206, %v202, 0.0
        %244 = vadd.xlane.f32.xlu0 %v243
        %v245 = vpop.xlane.xlu0 %244
        %v246 = vsel %vm206, %v203, 0.0
        %247 = vadd.xlane.f32.xlu0 %v246
        %v248 = vpop.xlane.xlu0 %247
        %v249 = vsel %vm206, %v204, 0.0
        %250 = vadd.xlane.f32.xlu0 %v249
        %v251 = vpop.xlane.xlu0 %250
        %v252 = vsel %vm206, %v205, 0.0
        %253 = vadd.xlane.f32.xlu0 %v252
        %v254 = vpop.xlane.xlu0 %253
        %s255 = sld [smem:[#allocation3]]
        %v256 = vstv %s255
        %v257 = vadd.f32 %v209, %v256
        %v258 = vadd.f32 %v212, %v256
        %v259 = vadd.f32 %v215, %v256
        %v260 = vadd.f32 %v218, %v256
        %v261 = vadd.f32 %v221, %v256
        %v262 = vadd.f32 %v224, %v256
        %v263 = vadd.f32 %v227, %v256
        %v264 = vadd.f32 %v230, %v256
        %v265 = vadd.f32 %v233, %v256
        %v266 = vadd.f32 %v236, %v256
        %v267 = vadd.f32 %v239, %v256
        %v268 = vadd.f32 %v242, %v256
        %v269 = vadd.f32 %v245, %v256
        %v270 = vadd.f32 %v248, %v256
        %v271 = vadd.f32 %v251, %v256
        %v272 = vadd.f32 %v254, %v256
        %v273 = vxor.u32 %v257, 2147483648
        %v274 = vxor.u32 %v258, 2147483648
        %v275 = vxor.u32 %v259, 2147483648
        %v276 = vxor.u32 %v260, 2147483648
        %v277 = vxor.u32 %v261, 2147483648
        %v278 = vxor.u32 %v262, 2147483648
        %v279 = vxor.u32 %v263, 2147483648
        %v280 = vxor.u32 %v264, 2147483648
        %v281 = vxor.u32 %v265, 2147483648
        %v282 = vxor.u32 %v266, 2147483648
        %v283 = vxor.u32 %v267, 2147483648
        %v284 = vxor.u32 %v268, 2147483648
        %v285 = vxor.u32 %v269, 2147483648
        %v286 = vxor.u32 %v270, 2147483648
        %v287 = vxor.u32 %v271, 2147483648
        %v288 = vxor.u32 %v272, 2147483648
        %v289 = vmul.f32 %v273, 1.442695
        %v290 = vpow.pop %v289
        %v291 = vmul.f32 %v274, 1.442695
        %v292 = vpow.pop %v291
        %v293 = vmul.f32 %v275, 1.442695
        %v294 = vpow.pop %v293
        %v295 = vmul.f32 %v276, 1.442695
        %v296 = vpow.pop %v295
        %v297 = vmul.f32 %v277, 1.442695
        %v298 = vpow.pop %v297
        %v299 = vmul.f32 %v278, 1.442695
        %v300 = vpow.pop %v299
        %v301 = vmul.f32 %v279, 1.442695
        %v302 = vpow.pop %v301
        %v303 = vmul.f32 %v280, 1.442695
        %v304 = vpow.pop %v303
        %v305 = vmul.f32 %v281, 1.442695
        %v306 = vpow.pop %v305
        %v307 = vmul.f32 %v282, 1.442695
        %v308 = vpow.pop %v307
        %v309 = vmul.f32 %v283, 1.442695
        %v310 = vpow.pop %v309
        %v311 = vmul.f32 %v284, 1.442695
        %v312 = vpow.pop %v311
        %v313 = vmul.f32 %v285, 1.442695
        %v314 = vpow.pop %v313
        %v315 = vmul.f32 %v286, 1.442695
        %v316 = vpow.pop %v315
        %v317 = vmul.f32 %v287, 1.442695
        %v318 = vpow.pop %v317
        %v319 = vmul.f32 %v288, 1.442695
        %v320 = vpow.pop %v319
        %v321 = vadd.f32 %v290, 1.0
        %v322 = vadd.f32 %v292, 1.0
        %v323 = vadd.f32 %v294, 1.0
        %v324 = vadd.f32 %v296, 1.0
        %v325 = vadd.f32 %v298, 1.0
        %v326 = vadd.f32 %v300, 1.0
        %v327 = vadd.f32 %v302, 1.0
        %v328 = vadd.f32 %v304, 1.0
        %v329 = vadd.f32 %v306, 1.0
        %v330 = vadd.f32 %v308, 1.0
        %v331 = vadd.f32 %v310, 1.0
        %v332 = vadd.f32 %v312, 1.0
        %v333 = vadd.f32 %v314, 1.0
        %v334 = vadd.f32 %v316, 1.0
        %v335 = vadd.f32 %v318, 1.0
        %v336 = vadd.f32 %v320, 1.0
        %v337 = vrcp.pop %v321
        %v338 = vmul.f32 1.0, %v337
        %v339 = vrcp.pop %v322
        %v340 = vmul.f32 1.0, %v339
        %v341 = vrcp.pop %v323
        %v342 = vmul.f32 1.0, %v341
        %v343 = vrcp.pop %v324
        %v344 = vmul.f32 1.0, %v343
        %v345 = vrcp.pop %v325
        %v346 = vmul.f32 1.0, %v345
        %v347 = vrcp.pop %v326
        %v348 = vmul.f32 1.0, %v347
        %v349 = vrcp.pop %v327
        %v350 = vmul.f32 1.0, %v349
        %v351 = vrcp.pop %v328
        %v352 = vmul.f32 1.0, %v351
        %v353 = vrcp.pop %v329
        %v354 = vmul.f32 1.0, %v353
        %v355 = vrcp.pop %v330
        %v356 = vmul.f32 1.0, %v355
        %v357 = vrcp.pop %v331
        %v358 = vmul.f32 1.0, %v357
        %v359 = vrcp.pop %v332
        %v360 = vmul.f32 1.0, %v359
        %v361 = vrcp.pop %v333
        %v362 = vmul.f32 1.0, %v361
        %v363 = vrcp.pop %v334
        %v364 = vmul.f32 1.0, %v363
        %v365 = vrcp.pop %v335
        %v366 = vmul.f32 1.0, %v365
        %v367 = vrcp.pop %v336
        %v368 = vmul.f32 1.0, %v367
        %vm369 = vcmask 7168
        %370 = vst.msk [vmem:[%s147] sm:$0xff] %vm369, %v338
        %371 = vst.msk [vmem:[%s147 + $0x8] sm:$0xff] %vm369, %v340
        %372 = vst.msk [vmem:[%s147 + $0x10] sm:$0xff] %vm369, %v342
        %373 = vst.msk [vmem:[%s147 + $0x18] sm:$0xff] %vm369, %v344
        %374 = vst.msk [vmem:[%s147 + $0x20] sm:$0xff] %vm369, %v346
        %375 = vst.msk [vmem:[%s147 + $0x28] sm:$0xff] %vm369, %v348
        %376 = vst.msk [vmem:[%s147 + $0x30] sm:$0xff] %vm369, %v350
        %377 = vst.msk [vmem:[%s147 + $0x38] sm:$0xff] %vm369, %v352
        %378 = vst.msk [vmem:[%s147 + $0x40] sm:$0xff] %vm369, %v354
        %379 = vst.msk [vmem:[%s147 + $0x48] sm:$0xff] %vm369, %v356
        %380 = vst.msk [vmem:[%s147 + $0x50] sm:$0xff] %vm369, %v358
        %381 = vst.msk [vmem:[%s147 + $0x58] sm:$0xff] %vm369, %v360
        %382 = vst.msk [vmem:[%s147 + $0x60] sm:$0xff] %vm369, %v362
        %383 = vst.msk [vmem:[%s147 + $0x68] sm:$0xff] %vm369, %v364
        %384 = vst.msk [vmem:[%s147 + $0x70] sm:$0xff] %vm369, %v366
        %385 = vst.msk [vmem:[%s147 + $0x78] sm:$0xff] %vm369, %v368
        %s386 = sand.u32 %s70, 1
        %s387 = sand.u32 %s70, 1
        %s388 = smul.addr %s387, 128
        %s389 = scalar_lea.vmem [#allocation4], %s388
        // Predicated region
        $region29: #{tpu_custom_call.1} parent=27 // pred_check
          %p390 = pneg %p80
        $region30: #{tpu_custom_call.1} parent=27 // pred_check_branch
          %392 = sbr.rel (%p390) target = $region32
        $region31: #{tpu_custom_call.1} parent=27 // pred_region
          %s393 = smul.u32 16, %s15
          %s394 = ssub.s32 38, %s393
          %p395 = scmp.lt.s32.totalorder %s394, 16
          %s396 = scalar_select %p395, %s394, 16
          %s397 = smul.u32 128, %s396
          %p398 = scmp.ne.s32.totalorder 0, %s397
          %s399 = smul.addr %s393, 8
          %s400 = scalar_lea.vmem %s3, %s399
          // Predicated region
          $region33: #{tpu_custom_call.1} parent=31 // pred_check
            %p401 = pneg %p398
          $region34: #{tpu_custom_call.1} parent=31 // pred_check_branch
            %403 = sbr.rel (%p401) target = $region36
          $region35: #{tpu_custom_call.1} parent=31 // pred_region
            // Predicated region
            $region37: #{tpu_custom_call.1} parent=35 // pred_check
              _
            $region38: #{tpu_custom_call.1} parent=35 // pred_check_branch
              %405 = sbr.rel (0) target = $region40
            $region39: #{tpu_custom_call.1} parent=35 // pred_region
              // Predicated region
              $region59: #{tpu_custom_call.1} parent=39 // pred_check
                _
              $region60: #{tpu_custom_call.1} parent=39 // pred_check_branch
                %485 = sbr.rel (0) target = $region62
              $region61: #{tpu_custom_call.1} parent=39 // pred_region
                %s486 = sshrl.u32 %s396, 4
                // While loop
                $region63: #{tpu_custom_call.1} parent=61 // loop_pre_header
                  _
                $region64: #{tpu_custom_call.1} parent=61 // loop_header
                  %s488 = sphi 0, %s490
                  %p489 = scmp.ge.s32.totalorder %s488, %s486
                  %s493 = sphi 0, %s530
                  %s494 = sphi %s389, %s533
                  %s495 = sphi %s400, %s534
                $region65: #{tpu_custom_call.1} parent=61 // loop_header_branch
                  %492 = sbr.rel (%p489) target = $region69
                $region66: #{tpu_custom_call.1} parent=61 // loop_body
                  %v496 = vld [vmem:[%s494] sm:$0xff]
                  %497 = vst [vmem:[%s495] sm:$0xff] %v496
                  %v498 = vld [vmem:[%s494 + $0x8] sm:$0xff]
                  %499 = vst [vmem:[%s495 + $0x8] sm:$0xff] %v498
                  %v500 = vld [vmem:[%s494 + $0x10] sm:$0xff]
                  %501 = vst [vmem:[%s495 + $0x10] sm:$0xff] %v500
                  %v502 = vld [vmem:[%s494 + $0x18] sm:$0xff]
                  %503 = vst [vmem:[%s495 + $0x18] sm:$0xff] %v502
                  %v504 = vld [vmem:[%s494 + $0x20] sm:$0xff]
                  %505 = vst [vmem:[%s495 + $0x20] sm:$0xff] %v504
                  %v506 = vld [vmem:[%s494 + $0x28] sm:$0xff]
                  %507 = vst [vmem:[%s495 + $0x28] sm:$0xff] %v506
                  %v508 = vld [vmem:[%s494 + $0x30] sm:$0xff]
                  %509 = vst [vmem:[%s495 + $0x30] sm:$0xff] %v508
                  %v510 = vld [vmem:[%s494 + $0x38] sm:$0xff]
                  %511 = vst [vmem:[%s495 + $0x38] sm:$0xff] %v510
                  %v512 = vld [vmem:[%s494 + $0x40] sm:$0xff]
                  %513 = vst [vmem:[%s495 + $0x40] sm:$0xff] %v512
                  %v514 = vld [vmem:[%s494 + $0x48] sm:$0xff]
                  %515 = vst [vmem:[%s495 + $0x48] sm:$0xff] %v514
                  %v516 = vld [vmem:[%s494 + $0x50] sm:$0xff]
                  %517 = vst [vmem:[%s495 + $0x50] sm:$0xff] %v516
                  %v518 = vld [vmem:[%s494 + $0x58] sm:$0xff]
                  %519 = vst [vmem:[%s495 + $0x58] sm:$0xff] %v518
                  %v520 = vld [vmem:[%s494 + $0x60] sm:$0xff]
                  %521 = vst [vmem:[%s495 + $0x60] sm:$0xff] %v520
                  %v522 = vld [vmem:[%s494 + $0x68] sm:$0xff]
                  %523 = vst [vmem:[%s495 + $0x68] sm:$0xff] %v522
                  %v524 = vld [vmem:[%s494 + $0x70] sm:$0xff]
                  %525 = vst [vmem:[%s495 + $0x70] sm:$0xff] %v524
                  %v526 = vld [vmem:[%s494 + $0x78] sm:$0xff]
                  %527 = vst [vmem:[%s495 + $0x78] sm:$0xff] %v526
                  %s528 = sadd.s32 1, %s493
                  %p529 = scmp.ge.s32.totalorder %s528, %s486
                  %s530 = scalar_select %p529, 0, %s528
                  %s531 = smul.u32 %s530, 128
                  %s532 = smul.u32 %s530, 128
                  %s533 = scalar_lea.vmem %s389, %s531 [#allocation4]
                  %s534 = scalar_lea.vmem %s400, %s532
                $region67: #{tpu_custom_call.1} parent=61 // loop_footer
                  %s490 = sadd.s32 %s488, 1
                $region68: #{tpu_custom_call.1} parent=61 // loop_footer_branch
                  %487 = sbr.rel target = $region64
                $region69: #{tpu_custom_call.1} parent=61 // loop_exit
                  _
                %s535 = sshrl.u32 %s396, 4
                %s536 = sand.u32 %s396, 15
                %s537 = smul.u32 %s535, 16
                %s538 = smul.u32 8, %s537
                %s539 = scalar_lea.vmem %s389, %s538 [#allocation4]
                %s540 = smul.u32 8, %s537
                %s541 = scalar_lea.vmem %s400, %s540
                // While loop
                $region70: #{tpu_custom_call.1} parent=61 // loop_pre_header
                  _
                $region71: #{tpu_custom_call.1} parent=61 // loop_header
                  %s543 = sphi 0, %s545
                  %p544 = scmp.ge.s32.totalorder %s543, %s536
                  %s548 = sphi 0, %s555
                  %s549 = sphi %s539, %s558
                  %s550 = sphi %s541, %s559
                $region72: #{tpu_custom_call.1} parent=61 // loop_header_branch
                  %547 = sbr.rel (%p544) target = $region76
                $region73: #{tpu_custom_call.1} parent=61 // loop_body
                  %v551 = vld [vmem:[%s549] sm:$0xff]
                  %552 = vst [vmem:[%s550] sm:$0xff] %v551
                  %s553 = sadd.s32 1, %s548
                  %p554 = scmp.ge.s32.totalorder %s553, %s536
                  %s555 = scalar_select %p554, 0, %s553
                  %s556 = smul.u32 %s555, 8
                  %s557 = smul.u32 %s555, 8
                  %s558 = scalar_lea.vmem %s539, %s556 [#allocation4]
                  %s559 = scalar_lea.vmem %s541, %s557
                $region74: #{tpu_custom_call.1} parent=61 // loop_footer
                  %s545 = sadd.s32 %s543, 1
                $region75: #{tpu_custom_call.1} parent=61 // loop_footer_branch
                  %542 = sbr.rel target = $region71
                $region76: #{tpu_custom_call.1} parent=61 // loop_exit
                  _
              $region62: #{tpu_custom_call.1} parent=39 // pred_fallthru
                _
              // Predicated region
              $region77: #{tpu_custom_call.1} parent=39 // pred_check
                _
              $region78: #{tpu_custom_call.1} parent=39 // pred_check_branch
                %561 = sbr.rel target = $region80
              $region79: #{tpu_custom_call.1} parent=39 // pred_region
                _
              $region80: #{tpu_custom_call.1} parent=39 // pred_fallthru
                _
            $region40: #{tpu_custom_call.1} parent=35 // pred_fallthru
              _
            // Predicated region
            $region41: #{tpu_custom_call.1} parent=35 // pred_check
              _
            $region42: #{tpu_custom_call.1} parent=35 // pred_check_branch
              %407 = sbr.rel target = $region44
            $region43: #{tpu_custom_call.1} parent=35 // pred_region
              %s409 = ssub.s32 256, 1
              %s410 = sshrl.u32 %s396, 4
              // While loop
              $region45: #{tpu_custom_call.1} parent=43 // loop_pre_header
                _
              $region46: #{tpu_custom_call.1} parent=43 // loop_header
                %s412 = sphi 0, %s414
                %p413 = scmp.ge.s32.totalorder %s412, %s410
                %s417 = sphi 0, %s454
                %s418 = sphi %s389, %s457
                %s419 = sphi %s400, %s458
              $region47: #{tpu_custom_call.1} parent=43 // loop_header_branch
                %416 = sbr.rel (%p413) target = $region51
              $region48: #{tpu_custom_call.1} parent=43 // loop_body
                %v420 = vld [vmem:[%s418] sm:%s409]
                %421 = vst [vmem:[%s419] sm:%s409] %v420
                %v422 = vld [vmem:[%s418 + $0x8] sm:%s409]
                %423 = vst [vmem:[%s419 + $0x8] sm:%s409] %v422
                %v424 = vld [vmem:[%s418 + $0x10] sm:%s409]
                %425 = vst [vmem:[%s419 + $0x10] sm:%s409] %v424
                %v426 = vld [vmem:[%s418 + $0x18] sm:%s409]
                %427 = vst [vmem:[%s419 + $0x18] sm:%s409] %v426
                %v428 = vld [vmem:[%s418 + $0x20] sm:%s409]
                %429 = vst [vmem:[%s419 + $0x20] sm:%s409] %v428
                %v430 = vld [vmem:[%s418 + $0x28] sm:%s409]
                %431 = vst [vmem:[%s419 + $0x28] sm:%s409] %v430
                %v432 = vld [vmem:[%s418 + $0x30] sm:%s409]
                %433 = vst [vmem:[%s419 + $0x30] sm:%s409] %v432
                %v434 = vld [vmem:[%s418 + $0x38] sm:%s409]
                %435 = vst [vmem:[%s419 + $0x38] sm:%s409] %v434
                %v436 = vld [vmem:[%s418 + $0x40] sm:%s409]
                %437 = vst [vmem:[%s419 + $0x40] sm:%s409] %v436
                %v438 = vld [vmem:[%s418 + $0x48] sm:%s409]
                %439 = vst [vmem:[%s419 + $0x48] sm:%s409] %v438
                %v440 = vld [vmem:[%s418 + $0x50] sm:%s409]
                %441 = vst [vmem:[%s419 + $0x50] sm:%s409] %v440
                %v442 = vld [vmem:[%s418 + $0x58] sm:%s409]
                %443 = vst [vmem:[%s419 + $0x58] sm:%s409] %v442
                %v444 = vld [vmem:[%s418 + $0x60] sm:%s409]
                %445 = vst [vmem:[%s419 + $0x60] sm:%s409] %v444
                %v446 = vld [vmem:[%s418 + $0x68] sm:%s409]
                %447 = vst [vmem:[%s419 + $0x68] sm:%s409] %v446
                %v448 = vld [vmem:[%s418 + $0x70] sm:%s409]
                %449 = vst [vmem:[%s419 + $0x70] sm:%s409] %v448
                %v450 = vld [vmem:[%s418 + $0x78] sm:%s409]
                %451 = vst [vmem:[%s419 + $0x78] sm:%s409] %v450
                %s452 = sadd.s32 1, %s417
                %p453 = scmp.ge.s32.totalorder %s452, %s410
                %s454 = scalar_select %p453, 0, %s452
                %s455 = smul.u32 %s454, 128
                %s456 = smul.u32 %s454, 128
                %s457 = scalar_lea.vmem %s389, %s455 [#allocation4]
                %s458 = scalar_lea.vmem %s400, %s456
              $region49: #{tpu_custom_call.1} parent=43 // loop_footer
                %s414 = sadd.s32 %s412, 1
              $region50: #{tpu_custom_call.1} parent=43 // loop_footer_branch
                %411 = sbr.rel target = $region46
              $region51: #{tpu_custom_call.1} parent=43 // loop_exit
                _
              %s459 = sshrl.u32 %s396, 4
              %s460 = sand.u32 %s396, 15
              %s461 = smul.u32 %s459, 16
              %s462 = smul.u32 8, %s461
              %s463 = scalar_lea.vmem %s389, %s462 [#allocation4]
              %s464 = smul.u32 8, %s461
              %s465 = scalar_lea.vmem %s400, %s464
              // While loop
              $region52: #{tpu_custom_call.1} parent=43 // loop_pre_header
                _
              $region53: #{tpu_custom_call.1} parent=43 // loop_header
                %s467 = sphi 0, %s469
                %p468 = scmp.ge.s32.totalorder %s467, %s460
                %s472 = sphi 0, %s479
                %s473 = sphi %s463, %s482
                %s474 = sphi %s465, %s483
              $region54: #{tpu_custom_call.1} parent=43 // loop_header_branch
                %471 = sbr.rel (%p468) target = $region58
              $region55: #{tpu_custom_call.1} parent=43 // loop_body
                %v475 = vld [vmem:[%s473] sm:%s409]
                %476 = vst [vmem:[%s474] sm:%s409] %v475
                %s477 = sadd.s32 1, %s472
                %p478 = scmp.ge.s32.totalorder %s477, %s460
                %s479 = scalar_select %p478, 0, %s477
                %s480 = smul.u32 %s479, 8
                %s481 = smul.u32 %s479, 8
                %s482 = scalar_lea.vmem %s463, %s480 [#allocation4]
                %s483 = scalar_lea.vmem %s465, %s481
              $region56: #{tpu_custom_call.1} parent=43 // loop_footer
                %s469 = sadd.s32 %s467, 1
              $region57: #{tpu_custom_call.1} parent=43 // loop_footer_branch
                %466 = sbr.rel target = $region53
              $region58: #{tpu_custom_call.1} parent=43 // loop_exit
                _
            $region44: #{tpu_custom_call.1} parent=35 // pred_fallthru
              _
          $region36: #{tpu_custom_call.1} parent=31 // pred_fallthru
            _
          %562 = vnop
        $region32: #{tpu_custom_call.1} parent=27 // pred_fallthru
          _
      $region28: #{tpu_custom_call.1} parent=5 // pred_fallthru
        _
      %p563 = scmp.le.s32.totalorder 2, %s10
      // Predicated region
      $region81: #{tpu_custom_call.1} parent=5 // pred_check
        %p564 = pneg %p563
      $region82: #{tpu_custom_call.1} parent=5 // pred_check_branch
        %566 = sbr.rel (%p564) target = $region84
      $region83: #{tpu_custom_call.1} parent=5 // pred_region
        %s567 = ssub.s32 %s10, 2
        // Predicated region
        $region85: #{tpu_custom_call.1} parent=83 // pred_check
          %p568 = pneg %p86
        $region86: #{tpu_custom_call.1} parent=83 // pred_check_branch
          %570 = sbr.rel (%p568) target = $region88
        $region87: #{tpu_custom_call.1} parent=83 // pred_region
          %s571 = sand.u32 %s71, 1
          %s572 = sand.u32 %s71, 1
          %s573 = smul.addr %s572, 128
          %s574 = scalar_lea.vmem [#allocation4], %s573
        $region88: #{tpu_custom_call.1} parent=83 // pred_fallthru
          _
      $region84: #{tpu_custom_call.1} parent=5 // pred_fallthru
        _
    $region6: #{tpu_custom_call.1} parent=1 // loop_footer
      %s14 = sadd.s32 1, %s10
    $region7: #{tpu_custom_call.1} parent=1 // loop_footer_branch
      %9 = sbr.rel target = $region3
    $region8: #{tpu_custom_call.1} parent=1 // loop_exit
      _

</llo_original>
